<compile_context>
chip_gen: v6e
topology: v6e:2x2x1
jax: 0.10.0
libtpu: 0.0.40
codegen_flags: <defaults>
</compile_context>

<pallas_src>
import functools

import jax
import jax.numpy as jnp
from jax.experimental import pallas as pl
from jax.experimental.pallas import tpu as pltpu


def _mbstd_kernel(x_ref, out_ref, *, G, F, c, HW):
    """One grid step: a (G, Mt, C*HW) tile holding Mt complete groups.

    x_ref  : (G, Mt, C*HW)        input dtype
    out_ref: (G, Mt, (C+F)*HW)    input dtype
    """
    CHW = F * c * HW
    Mt = x_ref.shape[1]

    x = x_ref[...]                        # keep in input dtype for the pass-through
    out_ref[:, :, :CHW] = x               # pass-through copy (no up-cast)

    xf = x.astype(jnp.float32)            # f32 only on the reduction path

    # Biased variance over the group axis, accumulated per group member so the
    # centered (G, Mt, C*HW) f32 temporary is never materialized.
    mu = jnp.mean(xf, axis=0)             # (Mt, C*HW)
    acc = jnp.zeros_like(mu)
    for g in range(G):                    # G <= group_size (small) -> fully unrolled
        d = xf[g] - mu
        acc = acc + d * d
    sd = jnp.sqrt(acc * (1.0 / G) + 1e-8)  # (Mt, C*HW)

    # Mean over (c, H, W) per feature channel: F static lane-slices, each reduced
    # over the lane axis. Constants are hoisted Python floats (no per-iter bcasts).
    span = c * HW
    inv_span = 1.0 / span
    for f in range(F):
        s = jnp.sum(sd[:, f * span:(f + 1) * span], axis=-1, keepdims=True)  # (Mt,1)
        stat_f = (s * inv_span).astype(out_ref.dtype)                         # (Mt,1)
        # Broadcast stat[m, f] to every (g, hw) position of its extra channel.
        out_ref[:, :, CHW + f * HW: CHW + (f + 1) * HW] = jnp.broadcast_to(
            stat_f[None], (G, Mt, HW))


def _pick_m_tile(M, per_m_bytes, budget_bytes, sublane):
    """Largest tile of the M axis that divides M, is either all of M or
    sublane-aligned, and fits the per-block byte budget (falls back to the
    smallest legal tile; the VMEM limit is raised below if that still overflows)."""
    cands = [d for d in range(1, M + 1)
             if M % d == 0 and (d == M or d % sublane == 0)]
    fitting = [d for d in cands if d * per_m_bytes <= budget_bytes]
    return max(fitting) if fitting else min(cands)


def minibatch_std_layer(x, group_size, num_channels=1, *,
                        block_budget_bytes=6 << 20):
    """x: (N, C, H, W) -> (N, C + num_channels, H, W)   (NCHW, PyTorch semantics)."""
    N, C, H, W = x.shape
    G = int(min(group_size, N)) if group_size is not None else int(N)
    assert N % G == 0, "batch must be divisible by the group size"
    F = int(num_channels)
    assert C % F == 0, "channels must be divisible by num_channels"
    c = C // F
    M = N // G
    HW = H * W
    CHW = C * HW
    FHW = F * HW

    # Free reshape (no data movement): batch index n = g*M + m, so viewing the
    # array as (G, M, C*H*W) puts every complete (stride-M) group into one tile's
    # leading axis and makes the trailing axis lane-dense.
    x3 = x.reshape(G, M, CHW)

    itemsize = jnp.dtype(x.dtype).itemsize
    sublane = max(8, 32 // itemsize)                  # 8 for f32, 16 for bf16
    per_m_bytes = G * (2 * CHW + FHW) * itemsize      # input + output rows per m
    Mt = _pick_m_tile(M, per_m_bytes, block_budget_bytes, sublane)
    grid = (M // Mt,)

    # Double-buffered in+out blocks; raise the scoped-VMEM limit only when needed
    # (defaults: 16 MiB v5e, 32 MiB v6e/v7x; stay well under v7x's 64 MiB physical).
    # TODO(synk): for very large C*H*W blocks (not the 4x4 epilogue case) the next
    # step would be a second "arbitrary" grid axis over HW with an (M, F)
    # accumulator instead of raising the limit further.
    block_bytes = Mt * per_m_bytes
    vmem_needed = 2 * block_bytes + (2 << 20)
    vmem_limit = int(min(vmem_needed, 48 << 20)) if vmem_needed > (12 << 20) else None

    kernel = functools.partial(_mbstd_kernel, G=G, F=F, c=c, HW=HW)
    out = pl.pallas_call(
        kernel,
        out_shape=jax.ShapeDtypeStruct((G, M, CHW + FHW), x.dtype),
        grid=grid,
        in_specs=[pl.BlockSpec((G, Mt, CHW), lambda m: (0, m, 0))],
        out_specs=pl.BlockSpec((G, Mt, CHW + FHW), lambda m: (0, m, 0)),
        compiler_params=pltpu.CompilerParams(
            dimension_semantics=("parallel",),
            vmem_limit_bytes=vmem_limit,
        ),
    )(x3)

    # Free reshape back: (G, M, (C+F)*H*W) -> (N, C+F, H, W).
    return out.reshape(N, C + F, H, W)


def _reference(x, group_size, num_channels=1):
    # Pure-JAX reference mirroring the PyTorch forward.
    N, C, H, W = x.shape
    G = int(min(group_size, N)) if group_size is not None else N
    F = num_channels
    c = C // F
    y = x.reshape(G, -1, F, c, H, W).astype(jnp.float32)
    y = y - jnp.mean(y, axis=0, keepdims=True)
    y = jnp.mean(jnp.square(y), axis=0)
    y = jnp.sqrt(y + 1e-8)
    y = jnp.mean(y, axis=(2, 3, 4))               # (N//G, F)
    y = y.reshape(-1, F, 1, 1)
    y = jnp.tile(y, (G, 1, H, W)).astype(x.dtype)
    return jnp.concatenate([x, y], axis=1)


if __name__ == "__main__":
    key = jax.random.PRNGKey(0)
    k1, k2, k3 = jax.random.split(key, 3)

    # 1) Small default config (single block, grid = 1).
    x1 = jax.random.normal(k1, (2, 4, 16, 16), dtype=jnp.float32)
    o1 = jax.block_until_ready(minibatch_std_layer(x1, group_size=2, num_channels=1))
    r1 = _reference(x1, 2, 1)
    assert o1.shape == (2, 5, 16, 16)
    assert jnp.allclose(o1, r1, atol=1e-5, rtol=1e-5)

    # 2) Larger batch, num_channels=2, with a small block budget so the M axis is
    #    actually tiled (Mt=8, grid of 2 pipelined blocks).
    x2 = jax.random.normal(k2, (32, 8, 16, 16), dtype=jnp.float32)
    o2 = jax.block_until_ready(
        minibatch_std_layer(x2, group_size=2, num_channels=2,
                            block_budget_bytes=400_000))
    r2 = _reference(x2, 2, 2)
    assert o2.shape == (32, 10, 16, 16)
    assert jnp.allclose(o2, r2, atol=1e-5, rtol=1e-5)

    # 3) bf16 input: pass-through copy stays bf16, reduction runs in f32.
    x3 = jax.random.normal(k3, (4, 4, 8, 8), dtype=jnp.bfloat16)
    o3 = jax.block_until_ready(minibatch_std_layer(x3, group_size=4, num_channels=1))
    r3 = _reference(x3, 4, 1)
    assert o3.shape == (4, 5, 8, 8)
    assert jnp.allclose(o3.astype(jnp.float32), r3.astype(jnp.float32),
                        atol=1e-2, rtol=1e-2)

    print("KERNEL_OK")
</pallas_src>

<mosaic_0001>
module attributes {stable_mosaic.version = 11 : i64} {
  func.func @_mbstd_kernel(%arg0: i32, %arg1: memref<2x1x1024xf32, #tpu.memory_space<vmem>>, %arg2: memref<2x1x1280xf32, #tpu.memory_space<vmem>>) attributes {dimension_semantics = [#tpu.dimension_semantics<parallel>], iteration_bounds = array<i64: 1>, scalar_prefetch = 0 : i64, scratch_operands = 0 : i64, tpu.core_type = #tpu.core_type<tc>, window_params = [{transform_indices = @transform_0, window_bounds = array<i64: 2, 1, 1024>}, {transform_indices = @transform_1, window_bounds = array<i64: 2, 1, 1280>}]} {
    %c0 = arith.constant 0 : index
    %c0_0 = arith.constant 0 : index
    %c0_1 = arith.constant 0 : index
    %0 = vector.load %arg1[%c0, %c0_0, %c0_1] : memref<2x1x1024xf32, #tpu.memory_space<vmem>>, vector<2x1x1024xf32>
    %c0_2 = arith.constant 0 : index
    %c0_3 = arith.constant 0 : index
    %c0_4 = arith.constant 0 : index
    %1 = vector.load %arg2[%c0_2, %c0_3, %c0_4] : memref<2x1x1280xf32, #tpu.memory_space<vmem>>, vector<2x1x1024xf32>
    tpu.vector_store %arg2[%c0_2, %c0_3, %c0_4], %0 {strides = array<i32>} : memref<2x1x1280xf32, #tpu.memory_space<vmem>>, vector<2x1x1024xf32>,
    %cst = arith.constant dense<0.000000e+00> : vector<1x1024xf32>
    %2 = vector.multi_reduction <add>, %0, %cst [0] : vector<2x1x1024xf32> to vector<1x1024xf32>
    %cst_5 = arith.constant 2.000000e+00 : f32
    %3 = vector.broadcast %cst_5 : f32 to vector<1x1024xf32>
    %4 = arith.divf %2, %3 : vector<1x1024xf32>
    %cst_6 = arith.constant 0.000000e+00 : f32
    %5 = vector.broadcast %cst_6 : f32 to vector<1x1024xf32>
    %6 = vector.extract_strided_slice %0 {offsets = [0, 0, 0], sizes = [1, 1, 1024], strides = [1, 1, 1]} : vector<2x1x1024xf32> to vector<1x1x1024xf32>
    %7 = vector.shape_cast %6 : vector<1x1x1024xf32> to vector<1x1024xf32>
    %8 = arith.subf %7, %4 : vector<1x1024xf32>
    %9 = arith.mulf %8, %8 : vector<1x1024xf32>
    %10 = arith.addf %5, %9 : vector<1x1024xf32>
    %11 = vector.extract_strided_slice %0 {offsets = [1, 0, 0], sizes = [1, 1, 1024], strides = [1, 1, 1]} : vector<2x1x1024xf32> to vector<1x1x1024xf32>
    %12 = vector.shape_cast %11 : vector<1x1x1024xf32> to vector<1x1024xf32>
    %13 = arith.subf %12, %4 : vector<1x1024xf32>
    %14 = arith.mulf %13, %13 : vector<1x1024xf32>
    %15 = arith.addf %10, %14 : vector<1x1024xf32>
    %cst_7 = arith.constant 5.000000e-01 : f32
    %16 = vector.broadcast %cst_7 : f32 to vector<1x1024xf32>
    %17 = arith.mulf %15, %16 : vector<1x1024xf32>
    %cst_8 = arith.constant 9.99999993E-9 : f32
    %18 = vector.broadcast %cst_8 : f32 to vector<1x1024xf32>
    %19 = arith.addf %17, %18 : vector<1x1024xf32>
    %20 = math.sqrt %19 : vector<1x1024xf32>
    %cst_9 = arith.constant dense<0.000000e+00> : vector<1xf32>
    %21 = vector.multi_reduction <add>, %20, %cst_9 [1] : vector<1x1024xf32> to vector<1xf32>
    %22 = vector.shape_cast %21 : vector<1xf32> to vector<1x1xf32>
    %cst_10 = arith.constant 9.765625E-4 : f32
    %23 = vector.broadcast %cst_10 : f32 to vector<1x1xf32>
    %24 = arith.mulf %22, %23 : vector<1x1xf32>
    %25 = vector.shape_cast %24 : vector<1x1xf32> to vector<1x1x1xf32>
    %26 = vector.shape_cast %25 : vector<1x1x1xf32> to vector<1x1x1xf32>
    %27 = vector.broadcast %26 : vector<1x1x1xf32> to vector<2x1x256xf32>
    %c0_11 = arith.constant 0 : index
    %c0_12 = arith.constant 0 : index
    %c1024 = arith.constant 1024 : index
    %28 = vector.load %arg2[%c0_11, %c0_12, %c1024] : memref<2x1x1280xf32, #tpu.memory_space<vmem>>, vector<2x1x256xf32>
    tpu.vector_store %arg2[%c0_11, %c0_12, %c1024], %27 {strides = array<i32>} : memref<2x1x1280xf32, #tpu.memory_space<vmem>>, vector<2x1x256xf32>,
    return
  }
  func.func @transform_0(%arg0: i32) -> (i32, i32, i32) {
    %c0_i32 = arith.constant 0 : i32
    %c0_i32_0 = arith.constant 0 : i32
    %c0_i32_1 = arith.constant 0 : i32
    return %c0_i32, %arg0, %c0_i32_0 : i32, i32, i32
  }
  func.func @transform_1(%arg0: i32) -> (i32, i32, i32) {
    %c0_i32 = arith.constant 0 : i32
    %c0_i32_0 = arith.constant 0 : i32
    %c0_i32_1 = arith.constant 0 : i32
    return %c0_i32, %arg0, %c0_i32_0 : i32, i32, i32
  }
}

</mosaic_0001>

<llo_original>
// kernel: tpu_custom_call.1
$region0: #{tpu_custom_call.1}
  #allocation0 [shape = 'u32[]', space=smem, size = 0x4, offset = 0x4, fixed_abs, tag = 'smem constant byte address 0x4 - core index']
  #allocation1 [shape = 'u32[144,128]{1,0:T(1,128)}', space=vmem, size = 0x12000, scoped, tag = 'internal scratch']
  %s0 = inlined_call_operand.hbm [shape: f32[2,1,1024], index: 0, kind: input, shape index: {}]
  %s1 = inlined_call_operand.hbm [shape: f32[2,1,1280], index: 1, kind: output, shape index: {}]
  %s2 = sld [smem:[#allocation0]]
  $region18: #{tpu_custom_call.1} parent=0
    _
  %s4 = ssub.s32 1, %s2
  %s5 = scalar_select 0, %s4, %s2
  $region1: #{tpu_custom_call.1} parent=0
    #allocation2 [shape = 'u8[8192]{0}', space=vmem, size = 0x2000, scoped, tag = 'input window, operand 0, single buffered']
    #allocation3 [shape = 's32[1]{0}', space=sflag, size = 0x4, scoped, tag = 'scoped memory for tpu_custom_call.1']
    #allocation4 [shape = 's32[1]{0}', space=sflag, size = 0x4, scoped, tag = 'scoped memory for tpu_custom_call.1']
    #allocation5 [shape = 'u8[10240]{0}', space=vmem, size = 0x2800, scoped, tag = 'output window, operand 0, single buffered']
    %6 = vsyncpa [#allocation3], 0
    %7 = vsyncpa [#allocation4], 0
    // Predicated region
    $region2: #{tpu_custom_call.1} parent=1 // pred_check
      _
    $region3: #{tpu_custom_call.1} parent=1 // pred_check_branch
      %9 = sbr.rel (0) target = $region5
    $region4: #{tpu_custom_call.1} parent=1 // pred_region
      %s11 = ssub.s32 256, 256
      %12 = vsyncadd [#allocation3], %s11
      %s13 = sshll.u32 [#allocation2], 4
      %s14 = int_to_ptr.vmem [resolvable:$true] %s13
      %19 = dma.hbm_to_vmem [thread:$0]  %s0, 256, %s14, [#allocation3], 128, 128, 8
    $region5: #{tpu_custom_call.1} parent=1 // pred_fallthru
      _
    // Predicated region
    $region6: #{tpu_custom_call.1} parent=1 // pred_check
      _
    $region7: #{tpu_custom_call.1} parent=1 // pred_check_branch
      %21 = sbr.rel (0) target = $region9
    $region8: #{tpu_custom_call.1} parent=1 // pred_region
      %22 = dma.done [#allocation3], 256
    $region9: #{tpu_custom_call.1} parent=1 // pred_fallthru
      _
    %v23 = vld [vmem:[#allocation2] sm:$0xff]
    %v24 = vld [vmem:[#allocation2 + $0x8] sm:$0xff]
    %25 = vst [vmem:[#allocation5] sm:$0xff] %v23
    %26 = vst [vmem:[#allocation5 + $0xa] sm:$0xff] %v24
    %v29 = vlaneseq
    %v30 = vshrl.u32 %v29, 7
    %v31 = vsub.s32 0, %v30
    %v32 = vrot.slane %v23, %v31
    %v33 = vlaneseq
    %v34 = vshrl.u32 %v33, 7
    %v35 = vsub.s32 1, %v34
    %v36 = vrot.slane %v23, %v35
    %v37 = vlaneseq
    %v38 = vshrl.u32 %v37, 7
    %v39 = vsub.s32 2, %v38
    %v40 = vrot.slane %v23, %v39
    %v41 = vlaneseq
    %v42 = vshrl.u32 %v41, 7
    %v43 = vsub.s32 3, %v42
    %v44 = vrot.slane %v23, %v43
    %v45 = vlaneseq
    %v46 = vshrl.u32 %v45, 7
    %v47 = vsub.s32 4, %v46
    %v48 = vrot.slane %v23, %v47
    %v49 = vlaneseq
    %v50 = vshrl.u32 %v49, 7
    %v51 = vsub.s32 5, %v50
    %v52 = vrot.slane %v23, %v51
    %v53 = vlaneseq
    %v54 = vshrl.u32 %v53, 7
    %v55 = vsub.s32 6, %v54
    %v56 = vrot.slane %v23, %v55
    %v57 = vlaneseq
    %v58 = vshrl.u32 %v57, 7
    %v59 = vsub.s32 7, %v58
    %v60 = vrot.slane %v23, %v59
    %v61 = vlaneseq
    %v62 = vshrl.u32 %v61, 7
    %v63 = vsub.s32 0, %v62
    %v64 = vrot.slane %v24, %v63
    %v65 = vlaneseq
    %v66 = vshrl.u32 %v65, 7
    %v67 = vsub.s32 1, %v66
    %v68 = vrot.slane %v24, %v67
    %v69 = vlaneseq
    %v70 = vshrl.u32 %v69, 7
    %v71 = vsub.s32 2, %v70
    %v72 = vrot.slane %v24, %v71
    %v73 = vlaneseq
    %v74 = vshrl.u32 %v73, 7
    %v75 = vsub.s32 3, %v74
    %v76 = vrot.slane %v24, %v75
    %v77 = vlaneseq
    %v78 = vshrl.u32 %v77, 7
    %v79 = vsub.s32 4, %v78
    %v80 = vrot.slane %v24, %v79
    %v81 = vlaneseq
    %v82 = vshrl.u32 %v81, 7
    %v83 = vsub.s32 5, %v82
    %v84 = vrot.slane %v24, %v83
    %v85 = vlaneseq
    %v86 = vshrl.u32 %v85, 7
    %v87 = vsub.s32 6, %v86
    %v88 = vrot.slane %v24, %v87
    %v89 = vlaneseq
    %v90 = vshrl.u32 %v89, 7
    %v91 = vsub.s32 7, %v90
    %v92 = vrot.slane %v24, %v91
    %vm109 = vcmask 1040384
    %v110 = vsel %vm109, %v32, 0.0
    %v111 = vsel %vm109, %v64, 0.0
    %v112 = vadd.f32 %v110, %v111
    %v113 = vsel %vm109, %v36, 0.0
    %v114 = vsel %vm109, %v68, 0.0
    %v115 = vadd.f32 %v113, %v114
    %v116 = vsel %vm109, %v40, 0.0
    %v117 = vsel %vm109, %v72, 0.0
    %v118 = vadd.f32 %v116, %v117
    %v119 = vsel %vm109, %v44, 0.0
    %v120 = vsel %vm109, %v76, 0.0
    %v121 = vadd.f32 %v119, %v120
    %v122 = vsel %vm109, %v48, 0.0
    %v123 = vsel %vm109, %v80, 0.0
    %v124 = vadd.f32 %v122, %v123
    %v125 = vsel %vm109, %v52, 0.0
    %v126 = vsel %vm109, %v84, 0.0
    %v127 = vadd.f32 %v125, %v126
    %v128 = vsel %vm109, %v56, 0.0
    %v129 = vsel %vm109, %v88, 0.0
    %v130 = vadd.f32 %v128, %v129
    %v131 = vsel %vm109, %v60, 0.0
    %v132 = vsel %vm109, %v92, 0.0
    %v133 = vadd.f32 %v131, %v132
    %v134 = vrcp.pop 2.0
    %v135 = vmul.f32 %v112, %v134
    %v136 = vmul.f32 %v115, %v134
    %v137 = vmul.f32 %v118, %v134
    %v138 = vmul.f32 %v121, %v134
    %v139 = vmul.f32 %v124, %v134
    %v140 = vmul.f32 %v127, %v134
    %v141 = vmul.f32 %v130, %v134
    %v142 = vmul.f32 %v133, %v134
    %v151 = vcombine.low %v135, %v136
    %v152 = vcombine.low %v137, %v138
    %v153 = vcombine.low %v139, %v140
    %v154 = vcombine.low %v141, %v142
    %v156 = vunpack.c.l.s4 1966171168
    %v157 = vunpack.c.0.s8 %v156
    %v158 = vlaneseq
    %v159 = vshrl.u32 %v158, 7
    %v160 = vsub.s32 %v157, %v159
    %v161 = vrot.slane %v151, %v160
    %v163 = vunpack.c.l.s4 1966171168
    %v164 = vunpack.c.0.s8 %v163
    %v165 = vlaneseq
    %v166 = vshrl.u32 %v165, 7
    %v167 = vsub.s32 %v164, %v166
    %v168 = vrot.slane %v152, %v167
    %v170 = vunpack.c.l.s4 1966171168
    %v171 = vunpack.c.0.s8 %v170
    %v172 = vlaneseq
    %v173 = vshrl.u32 %v172, 7
    %v174 = vsub.s32 %v171, %v173
    %v175 = vrot.slane %v153, %v174
    %v177 = vunpack.c.l.s4 1966171168
    %v178 = vunpack.c.0.s8 %v177
    %v179 = vlaneseq
    %v180 = vshrl.u32 %v179, 7
    %v181 = vsub.s32 %v178, %v180
    %v182 = vrot.slane %v154, %v181
    %v183 = vcombine.low %v161, %v168
    %v184 = vcombine.low %v175, %v182
    %v186 = vunpack.c.l.s4 1966171168
    %v187 = vunpack.c.0.s8 %v186
    %v188 = vlaneseq
    %v189 = vshrl.u32 %v188, 7
    %v190 = vsub.s32 %v187, %v189
    %v191 = vrot.slane %v183, %v190
    %v193 = vunpack.c.l.s4 1966171168
    %v194 = vunpack.c.0.s8 %v193
    %v195 = vlaneseq
    %v196 = vshrl.u32 %v195, 7
    %v197 = vsub.s32 %v194, %v196
    %v198 = vrot.slane %v184, %v197
    %v199 = vcombine.low %v191, %v198
    %v201 = vsub.f32 %v23, %v199
    %v202 = vmul.f32 %v201, %v201
    %v203 = vadd.f32 %v202, 0.0
    %v204 = vsub.f32 %v24, %v199
    %v205 = vmul.f32 %v204, %v204
    %v206 = vadd.f32 %v203, %v205
    %v207 = vmul.f32 %v206, 0.5
    %v208 = vadd.f32 %v207, 1e-08
    %v209 = vrsqrt.pop %v208
    %v210 = vmul.f32 %v208, %v209
    %vm211 = vcmp.eq.f32.partialorder %v208, inf
    %v212 = vsel %vm211, %v208, %v210
    %vm213 = vcmp.eq.f32.partialorder %v208, 0.0
    %v214 = vand.u32 %v208, 2147483648
    %v215 = vsel %vm213, %v214, %v212
    %v217 = vlaneseq
    %v218 = vshrl.u32 %v217, 7
    %v219 = vsub.s32 0, %v218
    %v220 = vrot.slane %v215, %v219
    %v221 = vlaneseq
    %v222 = vshrl.u32 %v221, 7
    %v223 = vsub.s32 1, %v222
    %v224 = vrot.slane %v215, %v223
    %v225 = vlaneseq
    %v226 = vshrl.u32 %v225, 7
    %v227 = vsub.s32 2, %v226
    %v228 = vrot.slane %v215, %v227
    %v229 = vlaneseq
    %v230 = vshrl.u32 %v229, 7
    %v231 = vsub.s32 3, %v230
    %v232 = vrot.slane %v215, %v231
    %v233 = vlaneseq
    %v234 = vshrl.u32 %v233, 7
    %v235 = vsub.s32 4, %v234
    %v236 = vrot.slane %v215, %v235
    %v237 = vlaneseq
    %v238 = vshrl.u32 %v237, 7
    %v239 = vsub.s32 5, %v238
    %v240 = vrot.slane %v215, %v239
    %v241 = vlaneseq
    %v242 = vshrl.u32 %v241, 7
    %v243 = vsub.s32 6, %v242
    %v244 = vrot.slane %v215, %v243
    %v245 = vlaneseq
    %v246 = vshrl.u32 %v245, 7
    %v247 = vsub.s32 7, %v246
    %v248 = vrot.slane %v215, %v247
    %v257 = vsel %vm109, %v220, 0.0
    %v258 = vsel %vm109, %v224, 0.0
    %v259 = vadd.f32 %v257, %v258
    %v260 = vsel %vm109, %v228, 0.0
    %v261 = vadd.f32 %v259, %v260
    %v262 = vsel %vm109, %v232, 0.0
    %v263 = vadd.f32 %v261, %v262
    %v264 = vsel %vm109, %v236, 0.0
    %v265 = vadd.f32 %v263, %v264
    %v266 = vsel %vm109, %v240, 0.0
    %v267 = vadd.f32 %v265, %v266
    %v268 = vsel %vm109, %v244, 0.0
    %v269 = vadd.f32 %v267, %v268
    %v270 = vsel %vm109, %v248, 0.0
    %v271 = vadd.f32 %v269, %v270
    %272 = vadd.xlane.f32.xlu0 %v271
    %v273 = vpop.xlane.xlu0 %272
    %v274 = vmul.f32 %v273, 0.0009765625
    %v276 = vlaneseq
    %v277 = vshrl.u32 %v276, 7
    %v278 = vsub.s32 0, %v277
    %v279 = vrot.slane %v274, %v278
    %v281 = vlaneseq
    %vm282 = vcmp.ge.s32.totalorder %v281, 0
    %vm283 = vcmp.lt.s32.totalorder %v281, 256
    %vm284 = vmand %vm282, %vm283
    %285 = vst.msk [vmem:[#allocation5 + $0x8] sm:$0x3] %vm284, %v279
    %286 = vst.msk [vmem:[#allocation5 + $0x12] sm:$0x3] %vm284, %v279
    // Predicated region
    $region10: #{tpu_custom_call.1} parent=1 // pred_check
      _
    $region11: #{tpu_custom_call.1} parent=1 // pred_check_branch
      %288 = sbr.rel (0) target = $region13
    $region12: #{tpu_custom_call.1} parent=1 // pred_region
      %s290 = ssub.s32 320, 320
      %291 = vsyncadd [#allocation4], %s290
      %s292 = sshll.u32 [#allocation5], 4
      %s293 = int_to_ptr.vmem [resolvable:$true] %s292
      %298 = dma.vmem_to_hbm [thread:$0]  %s293, 320, %s1, [#allocation4], 160, 160, 10
    $region13: #{tpu_custom_call.1} parent=1 // pred_fallthru
      _
    // Predicated region
    $region14: #{tpu_custom_call.1} parent=1 // pred_check
      _
    $region15: #{tpu_custom_call.1} parent=1 // pred_check_branch
      %300 = sbr.rel (0) target = $region17
    $region16: #{tpu_custom_call.1} parent=1 // pred_region
      %301 = dma.done [#allocation4], 320
    $region17: #{tpu_custom_call.1} parent=1 // pred_fallthru
      _
    %302 = vsyncpa [#allocation3], 1
    %303 = vsyncpa [#allocation4], 1

</llo_original>
